<compile_context>
chip_gen: v6e
topology: v6e:2x2x1
jax: 0.10.0
libtpu: 0.0.40
codegen_flags: <defaults>
</compile_context>

<pallas_src>
import functools

import jax
import jax.numpy as jnp
from jax import lax
from jax.experimental import pallas as pl
from jax.experimental.pallas import tpu as pltpu

# ----------------------------- model config ---------------------------------
NUM_FIELDS = 4
EMBED_SIZE = 8
INPUT_SIZE = 64               # vocab size of the embedding table
NUM_CROSS_LAYERS = 2
NUM_HIDDEN_LAYERS = 2
HIDDEN_SIZE = 32              # == input_dim so cross/dnn blocks merge cleanly
OUTPUT_DIM = 1
BATCH = 256

INPUT_DIM = NUM_FIELDS * EMBED_SIZE          # 32
FINAL_DIM = INPUT_DIM + HIDDEN_SIZE          # 64


# ------------------------------ Pallas kernel -------------------------------
def dcnv2_kernel(ids_ref, m0_ref, wbd_ref, aux_ref, out_ref, *, num_layers):
    # ids_ref: [F, TB]           int32 feature ids, batch on the lane axis
    # m0_ref:  [D + (D+H), F*V]  bf16: rows 0..D-1 = blockdiag(table^T),
    #                                  rows D..    = fused layer-0 weight @ blockdiag
    # wbd_ref: [L-1, D+H, D+H]   bf16 block-diag(cross_w[l], dnn_w[l])
    # aux_ref: [L+2, D+H, 1]     f32: [l]=layer-l bias, [L]=fc weight col, [L+1,0,0]=fc bias
    # out_ref: [1, TB]           f32 sigmoid(logits), lane-dense store
    D = INPUT_DIM
    DH = FINAL_DIM
    V = INPUT_SIZE
    F = NUM_FIELDS
    tb = ids_ref.shape[1]

    # ---- fused embedding gather: one-hot built on the VPU, "gathered" on MXU.
    ids = ids_ref[...]                                          # [F, TB] int32
    iota_v = lax.broadcasted_iota(jnp.int32, (V, tb), 0)        # vocab index / row
    onehot = jnp.concatenate(
        [(ids[f:f + 1, :] == iota_v).astype(jnp.bfloat16) for f in range(F)],
        axis=0)                                                 # [F*V, TB]

    # ---- single MXU dot yields x0 (flattened embeddings) AND layer-0 pre-acts.
    yz = jnp.dot(m0_ref[...], onehot,
                 preferred_element_type=jnp.float32)            # [D + DH, TB]
    x0 = yz[:D]                                                 # [D, TB]  f32
    z0 = yz[D:] + aux_ref[0]                                    # [DH, TB] f32

    x0_2 = jnp.concatenate([x0, x0], axis=0)                    # D == H, multiplier rows
    row_mask = lax.broadcasted_iota(jnp.int32, (DH, tb), 0) < D

    # layer 0: cross rows: x0*z + x0 ; dnn rows: relu(z)
    y = jnp.where(row_mask, x0_2 * z0 + x0_2, jnp.maximum(z0, 0.0))

    # remaining layers: one block-diagonal dot per layer, masked nonlinearity.
    for l in range(1, num_layers):
        z = jnp.dot(wbd_ref[l - 1], y.astype(jnp.bfloat16),
                    preferred_element_type=jnp.float32) + aux_ref[l]
        y = jnp.where(row_mask, x0_2 * z + y, jnp.maximum(z, 0.0))

    # output projection (no concat needed: y already = [x ; h]) on VPU + XLU.
    fw = aux_ref[num_layers]                                    # [DH, 1]
    fb = aux_ref[num_layers + 1]                                # [DH, 1], bias at row 0
    logit = jnp.sum(y * fw, axis=0, keepdims=True) + fb[0:1, :]  # [1, TB]

    # sigmoid(z) = 0.5 * tanh(0.5 z) + 0.5 : one EUP op, exact (no approx recip).
    out_ref[...] = 0.5 * jnp.tanh(0.5 * logit) + 0.5


# ------------------------------ host wrapper ---------------------------------
def dcnv2_forward(input_ids, m0, wbd, aux, *, tile_b=None):
    """input_ids: [B, F] int32. Returns sigmoid logits, shape [B] f32."""
    B = input_ids.shape[0]
    ids_t = input_ids.T.astype(jnp.int32)            # [F, B], batch on lanes (4 KiB)

    if tile_b is None:
        # Two max-size lane tiles feed both v7x TensorCores; a single
        # full-batch tile otherwise (v5e/v6e: 1 TC, kernel is overhead-bound).
        tile_b = B // 2 if (B % 256 == 0) else B
    assert B % tile_b == 0, "batch must divide tile_b (no host-side padding)"
    grid = (B // tile_b,)

    kernel = functools.partial(dcnv2_kernel, num_layers=NUM_CROSS_LAYERS)

    out = pl.pallas_call(
        kernel,
        out_shape=jax.ShapeDtypeStruct((1, B), jnp.float32),
        grid=grid,
        in_specs=[
            pl.BlockSpec((NUM_FIELDS, tile_b), lambda i: (0, i)),  # streamed ids
            pl.BlockSpec(m0.shape, lambda i: (0, 0)),              # resident weights
            pl.BlockSpec(wbd.shape, lambda i: (0, 0, 0)),          # resident weights
            pl.BlockSpec(aux.shape, lambda i: (0, 0, 0)),          # resident biases/fc
        ],
        out_specs=pl.BlockSpec((1, tile_b), lambda i: (0, i)),
        compiler_params=pltpu.CompilerParams(
            dimension_semantics=("parallel",),                     # megacore on v7x
        ),
    )(ids_t, m0, wbd, aux)
    return out[0]


# ---------------------------- parameter packing ------------------------------
def _block_diag(blocks):
    rows = sum(b.shape[0] for b in blocks)
    cols = sum(b.shape[1] for b in blocks)
    out = jnp.zeros((rows, cols), blocks[0].dtype)
    r = c = 0
    for b in blocks:
        out = out.at[r:r + b.shape[0], c:c + b.shape[1]].set(b)
        r += b.shape[0]
        c += b.shape[1]
    return out


def init_params(key):
    """Parameters in native PyTorch nn.Linear layout (weight = [out, in])."""
    ks = jax.random.split(key, 7)
    s = 0.1
    embed_tbl = s * jax.random.normal(ks[0], (INPUT_SIZE, EMBED_SIZE), jnp.float32)
    cross_w = s * jax.random.normal(
        ks[1], (NUM_CROSS_LAYERS, INPUT_DIM, INPUT_DIM), jnp.float32)
    cross_b = s * jax.random.normal(
        ks[2], (NUM_CROSS_LAYERS, INPUT_DIM), jnp.float32)
    dnn_w = s * jax.random.normal(
        ks[3], (NUM_HIDDEN_LAYERS, HIDDEN_SIZE, INPUT_DIM), jnp.float32)
    dnn_b = s * jax.random.normal(
        ks[4], (NUM_HIDDEN_LAYERS, HIDDEN_SIZE), jnp.float32)
    fc_w = s * jax.random.normal(ks[5], (OUTPUT_DIM, FINAL_DIM), jnp.float32)
    fc_b = s * jax.random.normal(ks[6], (OUTPUT_DIM,), jnp.float32)
    return embed_tbl, cross_w, cross_b, dnn_w, dnn_b, fc_w, fc_b


def pack_params(params):
    """Repack PyTorch-layout params into the 3 resident kernel operands."""
    embed_tbl, cross_w, cross_b, dnn_w, dnn_b, fc_w, fc_b = params
    assert NUM_CROSS_LAYERS == NUM_HIDDEN_LAYERS and INPUT_DIM == HIDDEN_SIZE
    L = NUM_CROSS_LAYERS
    bf = jnp.bfloat16

    # Block-diagonal transposed embedding table: [D, F*V].
    table_t = embed_tbl.T                                             # [E, V]
    bd = _block_diag([table_t] * NUM_FIELDS)                          # [D, F*V]
    # Fused layer-0 weight (cross W0 ; dnn W0), folded through the embedding.
    w0 = jnp.concatenate([cross_w[0], dnn_w[0]], axis=0)              # [D+H, D]
    m0 = jnp.concatenate([bd, w0 @ bd], axis=0).astype(bf)            # [D+(D+H), F*V]

    # Per-layer block-diagonal weights for layers 1..L-1.
    wbd = jnp.stack(
        [_block_diag([cross_w[l], dnn_w[l]]) for l in range(1, L)],
        axis=0).astype(bf)                                            # [L-1, D+H, D+H]

    # Single f32 operand: layer biases, fc weight column, fc bias.
    aux = jnp.zeros((L + 2, FINAL_DIM, 1), jnp.float32)
    for l in range(L):
        aux = aux.at[l, :, 0].set(jnp.concatenate([cross_b[l], dnn_b[l]]))
    aux = aux.at[L, :, 0].set(fc_w[0])                                # fc weight col
    aux = aux.at[L + 1, 0, 0].set(fc_b[0])                            # fc bias
    return m0, wbd, aux


# ------------------------- pure-JAX reference --------------------------------
def reference_forward(input_ids, params):
    embed_tbl, cross_w, cross_b, dnn_w, dnn_b, fc_w, fc_b = params
    feat = jnp.take(embed_tbl, input_ids, axis=0).reshape(input_ids.shape[0], -1)
    x0 = feat
    x = x0
    for l in range(NUM_CROSS_LAYERS):
        x = x0 * (x @ cross_w[l].T + cross_b[l]) + x
    h = x0
    for l in range(NUM_HIDDEN_LAYERS):
        h = jnp.maximum(h @ dnn_w[l].T + dnn_b[l], 0.0)
    final = jnp.concatenate([x, h], axis=-1)
    logits = final @ fc_w.T + fc_b
    return jax.nn.sigmoid(jnp.squeeze(logits, axis=-1))


# --------------------------------- main --------------------------------------
if __name__ == "__main__":
    key = jax.random.PRNGKey(0)
    pkey, ikey = jax.random.split(key)
    params = init_params(pkey)

    # input_ids: [B, num_fields] integer feature ids (PyTorch-style layout).
    input_ids = jax.random.randint(ikey, (BATCH, NUM_FIELDS), 0, INPUT_SIZE,
                                   dtype=jnp.int32)

    m0, wbd, aux = pack_params(params)
    out = dcnv2_forward(input_ids, m0, wbd, aux)
    out = jax.block_until_ready(out)                 # [B]

    ref = reference_forward(input_ids, params)
    assert out.shape == ref.shape == (BATCH,)
    # bf16 MXU operands with f32 accumulation; sigmoid is exact (tanh form).
    assert jnp.allclose(out, ref, atol=3e-3, rtol=1e-2), float(
        jnp.max(jnp.abs(out - ref)))

    print("KERNEL_OK")
</pallas_src>

<mosaic_0001>
module attributes {stable_mosaic.version = 11 : i64} {
  func.func @dcnv2_kernel(%arg0: i32, %arg1: memref<4x128xi32, #tpu.memory_space<vmem>>, %arg2: memref<96x256xbf16, #tpu.memory_space<vmem>>, %arg3: memref<1x64x64xbf16, #tpu.memory_space<vmem>>, %arg4: memref<4x64x1xf32, #tpu.memory_space<vmem>>, %arg5: memref<1x128xf32, #tpu.memory_space<vmem>>) attributes {dimension_semantics = [#tpu.dimension_semantics<parallel>], iteration_bounds = array<i64: 2>, scalar_prefetch = 0 : i64, scratch_operands = 0 : i64, tpu.core_type = #tpu.core_type<tc>, window_params = [{transform_indices = @transform_0, window_bounds = array<i64: 4, 128>}, {pipeline_mode = #tpu.pipeline_mode<synchronous>, transform_indices = @transform_1, window_bounds = array<i64: 96, 256>}, {pipeline_mode = #tpu.pipeline_mode<synchronous>, transform_indices = @transform_2, window_bounds = array<i64: 1, 64, 64>}, {pipeline_mode = #tpu.pipeline_mode<synchronous>, transform_indices = @transform_3, window_bounds = array<i64: 4, 64, 1>}, {transform_indices = @transform_4, window_bounds = array<i64: 1, 128>}]} {
    %c0 = arith.constant 0 : index
    %c0_0 = arith.constant 0 : index
    %0 = vector.load %arg1[%c0, %c0_0] : memref<4x128xi32, #tpu.memory_space<vmem>>, vector<4x128xi32>
    %1 = tpu.iota {dimensions = array<i32: 0>} : vector<64x128xi32>
    %2 = vector.extract_strided_slice %0 {offsets = [0, 0], sizes = [1, 128], strides = [1, 1]} : vector<4x128xi32> to vector<1x128xi32>
    %3 = vector.broadcast %2 : vector<1x128xi32> to vector<64x128xi32>
    %4 = arith.cmpi eq, %3, %1 : vector<64x128xi32>
    %5 = arith.extui %4 : vector<64x128xi1> to vector<64x128xi32>
    %6 = arith.sitofp %5 : vector<64x128xi32> to vector<64x128xf32>
    %7 = arith.truncf %6 : vector<64x128xf32> to vector<64x128xbf16>
    %8 = vector.extract_strided_slice %0 {offsets = [1, 0], sizes = [1, 128], strides = [1, 1]} : vector<4x128xi32> to vector<1x128xi32>
    %9 = vector.broadcast %8 : vector<1x128xi32> to vector<64x128xi32>
    %10 = arith.cmpi eq, %9, %1 : vector<64x128xi32>
    %11 = arith.extui %10 : vector<64x128xi1> to vector<64x128xi32>
    %12 = arith.sitofp %11 : vector<64x128xi32> to vector<64x128xf32>
    %13 = arith.truncf %12 : vector<64x128xf32> to vector<64x128xbf16>
    %14 = vector.extract_strided_slice %0 {offsets = [2, 0], sizes = [1, 128], strides = [1, 1]} : vector<4x128xi32> to vector<1x128xi32>
    %15 = vector.broadcast %14 : vector<1x128xi32> to vector<64x128xi32>
    %16 = arith.cmpi eq, %15, %1 : vector<64x128xi32>
    %17 = arith.extui %16 : vector<64x128xi1> to vector<64x128xi32>
    %18 = arith.sitofp %17 : vector<64x128xi32> to vector<64x128xf32>
    %19 = arith.truncf %18 : vector<64x128xf32> to vector<64x128xbf16>
    %20 = vector.extract_strided_slice %0 {offsets = [3, 0], sizes = [1, 128], strides = [1, 1]} : vector<4x128xi32> to vector<1x128xi32>
    %21 = vector.broadcast %20 : vector<1x128xi32> to vector<64x128xi32>
    %22 = arith.cmpi eq, %21, %1 : vector<64x128xi32>
    %23 = arith.extui %22 : vector<64x128xi1> to vector<64x128xi32>
    %24 = arith.sitofp %23 : vector<64x128xi32> to vector<64x128xf32>
    %25 = arith.truncf %24 : vector<64x128xf32> to vector<64x128xbf16>
    %26 = tpu.concatenate %7, %13, %19, %25 in 0 : vector<64x128xbf16>, vector<64x128xbf16>, vector<64x128xbf16>, vector<64x128xbf16> -> vector<256x128xbf16>
    %c0_1 = arith.constant 0 : index
    %c0_2 = arith.constant 0 : index
    %27 = vector.load %arg2[%c0_1, %c0_2] : memref<96x256xbf16, #tpu.memory_space<vmem>>, vector<96x256xbf16>
    %cst = arith.constant dense<0.000000e+00> : vector<96x128xf32>
    %28 = tpu.matmul %27, %26, %cst {dimension_numbers = #tpu.dot_dimension_numbers<[1], [0], [0], [1], [0, 0, 1, 1], [], []>} : vector<96x256xbf16>, vector<256x128xbf16>, vector<96x128xf32> -> vector<96x128xf32>
    %29 = vector.extract_strided_slice %28 {offsets = [0, 0], sizes = [32, 128], strides = [1, 1]} : vector<96x128xf32> to vector<32x128xf32>
    %30 = vector.extract_strided_slice %28 {offsets = [32, 0], sizes = [64, 128], strides = [1, 1]} : vector<96x128xf32> to vector<64x128xf32>
    %c0_3 = arith.constant 0 : index
    %c0_4 = arith.constant 0 : index
    %c0_5 = arith.constant 0 : index
    %31 = vector.load %arg4[%c0_3, %c0_4, %c0_5] : memref<4x64x1xf32, #tpu.memory_space<vmem>>, vector<1x64x1xf32>
    %32 = vector.shape_cast %31 : vector<1x64x1xf32> to vector<64x1xf32>
    %33 = vector.broadcast %32 : vector<64x1xf32> to vector<64x128xf32>
    %34 = arith.addf %30, %33 : vector<64x128xf32>
    %35 = tpu.concatenate %29, %29 in 0 : vector<32x128xf32>, vector<32x128xf32> -> vector<64x128xf32>
    %36 = tpu.iota {dimensions = array<i32: 0>} : vector<64x128xi32>
    %c32_i32 = arith.constant 32 : i32
    %37 = vector.broadcast %c32_i32 : i32 to vector<64x128xi32>
    %38 = arith.cmpi slt, %36, %37 : vector<64x128xi32>
    %39 = arith.mulf %35, %34 : vector<64x128xf32>
    %40 = arith.addf %39, %35 : vector<64x128xf32>
    %cst_6 = arith.constant 0.000000e+00 : f32
    %41 = vector.broadcast %cst_6 : f32 to vector<64x128xf32>
    %42 = arith.maximumf %34, %41 : vector<64x128xf32>
    %43 = arith.select %38, %40, %42 : vector<64x128xi1>, vector<64x128xf32>
    %c0_7 = arith.constant 0 : index
    %c0_8 = arith.constant 0 : index
    %c0_9 = arith.constant 0 : index
    %44 = vector.load %arg3[%c0_7, %c0_8, %c0_9] : memref<1x64x64xbf16, #tpu.memory_space<vmem>>, vector<1x64x64xbf16>
    %45 = vector.shape_cast %44 : vector<1x64x64xbf16> to vector<64x64xbf16>
    %46 = arith.truncf %43 : vector<64x128xf32> to vector<64x128xbf16>
    %cst_10 = arith.constant dense<0.000000e+00> : vector<64x128xf32>
    %47 = tpu.matmul %45, %46, %cst_10 {dimension_numbers = #tpu.dot_dimension_numbers<[1], [0], [0], [1], [0, 0, 1, 1], [], []>} : vector<64x64xbf16>, vector<64x128xbf16>, vector<64x128xf32> -> vector<64x128xf32>
    %c1 = arith.constant 1 : index
    %c0_11 = arith.constant 0 : index
    %c0_12 = arith.constant 0 : index
    %48 = vector.load %arg4[%c1, %c0_11, %c0_12] : memref<4x64x1xf32, #tpu.memory_space<vmem>>, vector<1x64x1xf32>
    %49 = vector.shape_cast %48 : vector<1x64x1xf32> to vector<64x1xf32>
    %50 = vector.broadcast %49 : vector<64x1xf32> to vector<64x128xf32>
    %51 = arith.addf %47, %50 : vector<64x128xf32>
    %52 = arith.mulf %35, %51 : vector<64x128xf32>
    %53 = arith.addf %52, %43 : vector<64x128xf32>
    %cst_13 = arith.constant 0.000000e+00 : f32
    %54 = vector.broadcast %cst_13 : f32 to vector<64x128xf32>
    %55 = arith.maximumf %51, %54 : vector<64x128xf32>
    %56 = arith.select %38, %53, %55 : vector<64x128xi1>, vector<64x128xf32>
    %c2 = arith.constant 2 : index
    %c0_14 = arith.constant 0 : index
    %c0_15 = arith.constant 0 : index
    %57 = vector.load %arg4[%c2, %c0_14, %c0_15] : memref<4x64x1xf32, #tpu.memory_space<vmem>>, vector<1x64x1xf32>
    %58 = vector.shape_cast %57 : vector<1x64x1xf32> to vector<64x1xf32>
    %c3 = arith.constant 3 : index
    %c0_16 = arith.constant 0 : index
    %c0_17 = arith.constant 0 : index
    %59 = vector.load %arg4[%c3, %c0_16, %c0_17] : memref<4x64x1xf32, #tpu.memory_space<vmem>>, vector<1x64x1xf32>
    %60 = vector.shape_cast %59 : vector<1x64x1xf32> to vector<64x1xf32>
    %61 = vector.broadcast %58 : vector<64x1xf32> to vector<64x128xf32>
    %62 = arith.mulf %56, %61 : vector<64x128xf32>
    %cst_18 = arith.constant dense<0.000000e+00> : vector<128xf32>
    %63 = vector.multi_reduction <add>, %62, %cst_18 [0] : vector<64x128xf32> to vector<128xf32>
    %64 = vector.shape_cast %63 : vector<128xf32> to vector<1x128xf32>
    %65 = vector.extract_strided_slice %60 {offsets = [0, 0], sizes = [1, 1], strides = [1, 1]} : vector<64x1xf32> to vector<1x1xf32>
    %66 = vector.broadcast %65 : vector<1x1xf32> to vector<1x128xf32>
    %67 = arith.addf %64, %66 : vector<1x128xf32>
    %cst_19 = arith.constant 5.000000e-01 : f32
    %68 = vector.broadcast %cst_19 : f32 to vector<1x128xf32>
    %69 = arith.mulf %68, %67 : vector<1x128xf32>
    %70 = math.tanh %69 : vector<1x128xf32>
    %cst_20 = arith.constant 5.000000e-01 : f32
    %71 = vector.broadcast %cst_20 : f32 to vector<1x128xf32>
    %72 = arith.mulf %71, %70 : vector<1x128xf32>
    %cst_21 = arith.constant 5.000000e-01 : f32
    %73 = vector.broadcast %cst_21 : f32 to vector<1x128xf32>
    %74 = arith.addf %72, %73 : vector<1x128xf32>
    %c0_22 = arith.constant 0 : index
    %c0_23 = arith.constant 0 : index
    %75 = vector.load %arg5[%c0_22, %c0_23] : memref<1x128xf32, #tpu.memory_space<vmem>>, vector<1x128xf32>
    tpu.vector_store %arg5[%c0_22, %c0_23], %74 {strides = array<i32>} : memref<1x128xf32, #tpu.memory_space<vmem>>, vector<1x128xf32>,
    return
  }
  func.func @transform_0(%arg0: i32) -> (i32, i32) {
    %c0_i32 = arith.constant 0 : i32
    %c0_i32_0 = arith.constant 0 : i32
    return %c0_i32, %arg0 : i32, i32
  }
  func.func @transform_1(%arg0: i32) -> (i32, i32) {
    %c0_i32 = arith.constant 0 : i32
    %c0_i32_0 = arith.constant 0 : i32
    %c0_i32_1 = arith.constant 0 : i32
    return %c0_i32, %c0_i32_0 : i32, i32
  }
  func.func @transform_2(%arg0: i32) -> (i32, i32, i32) {
    %c0_i32 = arith.constant 0 : i32
    %c0_i32_0 = arith.constant 0 : i32
    %c0_i32_1 = arith.constant 0 : i32
    %c0_i32_2 = arith.constant 0 : i32
    return %c0_i32, %c0_i32_0, %c0_i32_1 : i32, i32, i32
  }
  func.func @transform_3(%arg0: i32) -> (i32, i32, i32) {
    %c0_i32 = arith.constant 0 : i32
    %c0_i32_0 = arith.constant 0 : i32
    %c0_i32_1 = arith.constant 0 : i32
    %c0_i32_2 = arith.constant 0 : i32
    return %c0_i32, %c0_i32_0, %c0_i32_1 : i32, i32, i32
  }
  func.func @transform_4(%arg0: i32) -> (i32, i32) {
    %c0_i32 = arith.constant 0 : i32
    %c0_i32_0 = arith.constant 0 : i32
    return %c0_i32, %arg0 : i32, i32
  }
}

</mosaic_0001>

<llo_original>
// kernel: tpu_custom_call.1
$region0: #{tpu_custom_call.1}
  #allocation0 [shape = 'u32[]', space=smem, size = 0x4, offset = 0x4, fixed_abs, tag = 'smem constant byte address 0x4 - core index']
  #allocation1 [shape = 'u32[144,128]{1,0:T(1,128)}', space=vmem, size = 0x12000, scoped, tag = 'internal scratch']
  %s0 = inlined_call_operand.vmem [shape: s32[4,256], index: 0, kind: input, shape index: {}]
  %s1 = inlined_call_operand.vmem [shape: bf16[96,256], index: 1, kind: input, shape index: {}]
  %s2 = inlined_call_operand.vmem [shape: bf16[1,64,64], index: 2, kind: input, shape index: {}]
  %s3 = inlined_call_operand.vmem [shape: f32[4,64,1], index: 3, kind: input, shape index: {}]
  %s4 = inlined_call_operand.hbm [shape: f32[1,256], index: 4, kind: output, shape index: {}]
  %s5 = sld [smem:[#allocation0]]
  $region49: #{tpu_custom_call.1} parent=0
    _
  %s7 = ssub.s32 1, %s5
  %s8 = scalar_select 0, %s7, %s5
  $region1: #{tpu_custom_call.1} parent=0
    #allocation2 [shape = 'u8[1024]{0}', space=vmem, size = 0x400, scoped, tag = 'output window, operand 0']
    #allocation3 [shape = 's32[2]{0}', space=sflag, size = 0x8, scoped, tag = 'scoped memory for tpu_custom_call.1']
    %9 = vsyncpa [#allocation3], 0
    %s10 = scalar_lea.sflag [#allocation3], 1
    %11 = vsyncpa %s10, 0
    loop: start=0, step=1, limit=4
    $region2: #{tpu_custom_call.1} parent=1 // loop_pre_header
      _
    $region3: #{tpu_custom_call.1} parent=1 // loop_header
      %s13 = sphi 0, %s17
      %p14 = scmp.ge.s32.totalorder %s13, 4
      %s23 = sphi 0, %s25
      %s26 = sphi 0, %s23
      %s27 = sphi 0, %s26
      %s43 = sphi 0, %s27
      %s47 = sphi 0, %s47
      %s49 = sphi 0, %s47
      %s50 = sphi 0, %s49
      %s64 = sphi 0, %s50
      %s68 = sphi 0, %s68
      %s70 = sphi 0, %s68
      %s71 = sphi 0, %s70
      %s85 = sphi 0, %s71
      %s89 = sphi 0, %s89
      %s91 = sphi 0, %s89
      %s92 = sphi 0, %s91
      %s106 = sphi 0, %s92
      %s112 = sphi 0, %s114
      %s115 = sphi 0, %s112
      %s116 = sphi 0, %s115
      %s132 = sphi 0, %s116
    $region4: #{tpu_custom_call.1} parent=1 // loop_header_branch
      %16 = sbr.rel (%p14) target = $region8
    $region5: #{tpu_custom_call.1} parent=1 // loop_body
      %s18 = ssub.s32 %s13, 1
      %s19 = ssub.s32 %s13, 2
      %s20 = sadd.s32 %s13, 1
      %s21 = ssub.s32 %s13, %s20
      %p22 = scmp.eq.s32.totalorder %s21, 0
      %s24 = sadd.s32 %s23, 1
      %s25 = scalar_select %p22, %s23, %s24
      %p28 = pneg %p22
      %p29 = scmp.eq.s32.totalorder %s13, 1
      %p30 = por %p28, %p29
      %p31 = scmp.ne.s32.totalorder %s23, %s26
      %p32 = scmp.eq.s32.totalorder %s13, 0
      %p33 = por %p31, %p32
      %p34 = scmp.ne.s32.totalorder %s23, %s26
      %p35 = scmp.eq.s32.totalorder %s18, 1
      %p36 = por %p34, %p35
      %p37 = scmp.ne.s32.totalorder %s26, %s27
      %p38 = scmp.eq.s32.totalorder %s18, 0
      %p39 = por %p37, %p38
      %p40 = scmp.ne.s32.totalorder %s26, %s27
      %p41 = scmp.eq.s32.totalorder %s19, 1
      %p42 = por %p40, %p41
      %p44 = scmp.ne.s32.totalorder %s27, %s43
      %p45 = scmp.eq.s32.totalorder %s19, 0
      %p46 = por %p44, %p45
      %s48 = sadd.s32 %s47, 1
      %p51 = scmp.eq.s32.totalorder %s13, 1
      %p52 = scmp.ne.s32.totalorder %s47, %s49
      %p53 = scmp.eq.s32.totalorder %s13, 0
      %p54 = por %p52, %p53
      %p55 = scmp.ne.s32.totalorder %s47, %s49
      %p56 = scmp.eq.s32.totalorder %s18, 1
      %p57 = por %p55, %p56
      %p58 = scmp.ne.s32.totalorder %s49, %s50
      %p59 = scmp.eq.s32.totalorder %s18, 0
      %p60 = por %p58, %p59
      %p61 = scmp.ne.s32.totalorder %s49, %s50
      %p62 = scmp.eq.s32.totalorder %s19, 1
      %p63 = por %p61, %p62
      %p65 = scmp.ne.s32.totalorder %s50, %s64
      %p66 = scmp.eq.s32.totalorder %s19, 0
      %p67 = por %p65, %p66
      %s69 = sadd.s32 %s68, 1
      %p72 = scmp.eq.s32.totalorder %s13, 1
      %p73 = scmp.ne.s32.totalorder %s68, %s70
      %p74 = scmp.eq.s32.totalorder %s13, 0
      %p75 = por %p73, %p74
      %p76 = scmp.ne.s32.totalorder %s68, %s70
      %p77 = scmp.eq.s32.totalorder %s18, 1
      %p78 = por %p76, %p77
      %p79 = scmp.ne.s32.totalorder %s70, %s71
      %p80 = scmp.eq.s32.totalorder %s18, 0
      %p81 = por %p79, %p80
      %p82 = scmp.ne.s32.totalorder %s70, %s71
      %p83 = scmp.eq.s32.totalorder %s19, 1
      %p84 = por %p82, %p83
      %p86 = scmp.ne.s32.totalorder %s71, %s85
      %p87 = scmp.eq.s32.totalorder %s19, 0
      %p88 = por %p86, %p87
      %s90 = sadd.s32 %s89, 1
      %p93 = scmp.eq.s32.totalorder %s13, 1
      %p94 = scmp.ne.s32.totalorder %s89, %s91
      %p95 = scmp.eq.s32.totalorder %s13, 0
      %p96 = por %p94, %p95
      %p97 = scmp.ne.s32.totalorder %s89, %s91
      %p98 = scmp.eq.s32.totalorder %s18, 1
      %p99 = por %p97, %p98
      %p100 = scmp.ne.s32.totalorder %s91, %s92
      %p101 = scmp.eq.s32.totalorder %s18, 0
      %p102 = por %p100, %p101
      %p103 = scmp.ne.s32.totalorder %s91, %s92
      %p104 = scmp.eq.s32.totalorder %s19, 1
      %p105 = por %p103, %p104
      %p107 = scmp.ne.s32.totalorder %s92, %s106
      %p108 = scmp.eq.s32.totalorder %s19, 0
      %p109 = por %p107, %p108
      %s110 = ssub.s32 %s13, %s20
      %p111 = scmp.eq.s32.totalorder %s110, 0
      %s113 = sadd.s32 %s112, 1
      %s114 = scalar_select %p111, %s112, %s113
      %p117 = pneg %p111
      %p118 = scmp.eq.s32.totalorder %s13, 1
      %p119 = por %p117, %p118
      %p120 = scmp.ne.s32.totalorder %s112, %s115
      %p121 = scmp.eq.s32.totalorder %s13, 0
      %p122 = por %p120, %p121
      %p123 = scmp.ne.s32.totalorder %s112, %s115
      %p124 = scmp.eq.s32.totalorder %s18, 1
      %p125 = por %p123, %p124
      %p126 = scmp.ne.s32.totalorder %s115, %s116
      %p127 = scmp.eq.s32.totalorder %s18, 0
      %p128 = por %p126, %p127
      %p129 = scmp.ne.s32.totalorder %s115, %s116
      %p130 = scmp.eq.s32.totalorder %s19, 1
      %p131 = por %p129, %p130
      %p133 = scmp.ne.s32.totalorder %s116, %s132
      %p134 = scmp.eq.s32.totalorder %s19, 0
      %p135 = por %p133, %p134
      %p136 = scmp.le.s32.totalorder 1, %s13
      %p137 = scmp.lt.s32.totalorder %s13, 3
      %p138 = pnand %p136, %p137
      %p139 = pneg %p138
      // Predicated region
      $region9: #{tpu_custom_call.1} parent=5 // pred_check
        _
      $region10: #{tpu_custom_call.1} parent=5 // pred_check_branch
        %141 = sbr.rel (%p138) target = $region12
      $region11: #{tpu_custom_call.1} parent=5 // pred_region
        %s142 = ssub.s32 %s13, 1
        // Predicated region
        $region13: #{tpu_custom_call.1} parent=11 // pred_check
          %p143 = pneg %p60
        $region14: #{tpu_custom_call.1} parent=11 // pred_check_branch
          %145 = sbr.rel (%p143) target = $region16
        $region15: #{tpu_custom_call.1} parent=11 // pred_region
          _
        $region16: #{tpu_custom_call.1} parent=11 // pred_fallthru
          _
        // Predicated region
        $region17: #{tpu_custom_call.1} parent=11 // pred_check
          %p146 = pneg %p81
        $region18: #{tpu_custom_call.1} parent=11 // pred_check_branch
          %148 = sbr.rel (%p146) target = $region20
        $region19: #{tpu_custom_call.1} parent=11 // pred_region
          _
        $region20: #{tpu_custom_call.1} parent=11 // pred_fallthru
          _
        // Predicated region
        $region21: #{tpu_custom_call.1} parent=11 // pred_check
          %p149 = pneg %p102
        $region22: #{tpu_custom_call.1} parent=11 // pred_check_branch
          %151 = sbr.rel (%p149) target = $region24
        $region23: #{tpu_custom_call.1} parent=11 // pred_region
          _
        $region24: #{tpu_custom_call.1} parent=11 // pred_fallthru
          _
      $region12: #{tpu_custom_call.1} parent=5 // pred_fallthru
        _
      %p152 = scmp.lt.s32.totalorder %s13, 2
      // Predicated region
      $region25: #{tpu_custom_call.1} parent=5 // pred_check
        %p153 = pneg %p152
      $region26: #{tpu_custom_call.1} parent=5 // pred_check_branch
        %155 = sbr.rel (%p153) target = $region28
      $region27: #{tpu_custom_call.1} parent=5 // pred_region
        // Predicated region
        $region29: #{tpu_custom_call.1} parent=27 // pred_check
          %p156 = pneg %p33
        $region30: #{tpu_custom_call.1} parent=27 // pred_check_branch
          %158 = sbr.rel (%p156) target = $region32
        $region31: #{tpu_custom_call.1} parent=27 // pred_region
          %p159 = scmp.lt.s32.totalorder %s13, 1
          %s160 = scalar_select %p159, %s13, 1
          %s161 = smul.addr %s160, 4
          %s162 = scalar_lea.vmem %s0, %s161
        $region32: #{tpu_custom_call.1} parent=27 // pred_fallthru
          _
      $region28: #{tpu_custom_call.1} parent=5 // pred_fallthru
        _
      %p163 = scmp.le.s32.totalorder 1, %s13
      %p164 = scmp.lt.s32.totalorder %s13, 3
      %p165 = pnand %p163, %p164
      %p166 = pneg %p165
      // Predicated region
      $region33: #{tpu_custom_call.1} parent=5 // pred_check
        _
      $region34: #{tpu_custom_call.1} parent=5 // pred_check_branch
        %168 = sbr.rel (%p165) target = $region36
      $region35: #{tpu_custom_call.1} parent=5 // pred_region
        %s169 = ssub.s32 %s13, 1
        %p170 = scmp.lt.s32.totalorder %s18, 1
        %s171 = scalar_select %p170, %s18, 1
        %s172 = smul.addr %s171, 4
        %s173 = scalar_lea.vmem %s0, %s172
        %p174 = pneg %p39
        %p175 = pneg %p36
        %p176 = pneg %p60
        %p177 = pneg %p57
        %p178 = pneg %p81
        %p179 = pneg %p78
        %p180 = pneg %p102
        %p181 = pneg %p99
        %p182 = pneg %p128
        %p183 = pneg %p125
        %s184 = sand.u32 %s115, 1
        %s185 = scalar_lea.sflag [#allocation3], %s184
        %s186 = sand.u32 %s115, 1
        %s187 = scalar_lea.vmem [#allocation2], %s186
        %p188 = scmp.lt.s32.totalorder %s18, 1
        %s189 = scalar_select %p188, %s18, 1
        %s190 = smul.addr %s189, 4
        %s191 = scalar_lea.vmem %s0, %s190
        %v193 = vld [vmem:[%s191] sm:$0xf]
        %v194 = vlaneseq
        %v195 = vshrl.u32 %v194, 7
        %v196 = vadd.s32 %v195, 8
        %v197 = vadd.s32 %v195, 16
        %v198 = vadd.s32 %v195, 24
        %v199 = vadd.s32 %v195, 32
        %v200 = vadd.s32 %v195, 40
        %v201 = vadd.s32 %v195, 48
        %v202 = vadd.s32 %v195, 56
        %v203 = vlaneseq
        %v204 = vshrl.u32 %v203, 7
        %v205 = vsub.s32 0, %v204
        %v206 = vrot.slane %v193, %v205
        %vm207 = vcmp.eq.s32.totalorder %v206, %v195
        %vm208 = vcmp.eq.s32.totalorder %v206, %v196
        %vm209 = vcmp.eq.s32.totalorder %v206, %v197
        %vm210 = vcmp.eq.s32.totalorder %v206, %v198
        %vm211 = vcmp.eq.s32.totalorder %v206, %v199
        %vm212 = vcmp.eq.s32.totalorder %v206, %v200
        %vm213 = vcmp.eq.s32.totalorder %v206, %v201
        %vm214 = vcmp.eq.s32.totalorder %v206, %v202
        %v215 = vsel %vm207, 1, 0
        %v216 = vsel %vm208, 1, 0
        %v217 = vsel %vm209, 1, 0
        %v218 = vsel %vm210, 1, 0
        %v219 = vsel %vm211, 1, 0
        %v220 = vsel %vm212, 1, 0
        %v221 = vsel %vm213, 1, 0
        %v222 = vsel %vm214, 1, 0
        %v223 = vcvt.s32.f32 %v215
        %v224 = vcvt.s32.f32 %v216
        %v225 = vcvt.s32.f32 %v217
        %v226 = vcvt.s32.f32 %v218
        %v227 = vcvt.s32.f32 %v219
        %v228 = vcvt.s32.f32 %v220
        %v229 = vcvt.s32.f32 %v221
        %v230 = vcvt.s32.f32 %v222
        %v231 = vpack.c.bf16 %v224, %v223
        %v232 = vpack.c.bf16 %v226, %v225
        %v233 = vpack.c.bf16 %v228, %v227
        %v234 = vpack.c.bf16 %v230, %v229
        %v235 = vlaneseq
        %v236 = vshrl.u32 %v235, 7
        %v237 = vsub.s32 1, %v236
        %v238 = vrot.slane %v193, %v237
        %vm239 = vcmp.eq.s32.totalorder %v238, %v195
        %vm240 = vcmp.eq.s32.totalorder %v238, %v196
        %vm241 = vcmp.eq.s32.totalorder %v238, %v197
        %vm242 = vcmp.eq.s32.totalorder %v238, %v198
        %vm243 = vcmp.eq.s32.totalorder %v238, %v199
        %vm244 = vcmp.eq.s32.totalorder %v238, %v200
        %vm245 = vcmp.eq.s32.totalorder %v238, %v201
        %vm246 = vcmp.eq.s32.totalorder %v238, %v202
        %v247 = vsel %vm239, 1, 0
        %v248 = vsel %vm240, 1, 0
        %v249 = vsel %vm241, 1, 0
        %v250 = vsel %vm242, 1, 0
        %v251 = vsel %vm243, 1, 0
        %v252 = vsel %vm244, 1, 0
        %v253 = vsel %vm245, 1, 0
        %v254 = vsel %vm246, 1, 0
        %v255 = vcvt.s32.f32 %v247
        %v256 = vcvt.s32.f32 %v248
        %v257 = vcvt.s32.f32 %v249
        %v258 = vcvt.s32.f32 %v250
        %v259 = vcvt.s32.f32 %v251
        %v260 = vcvt.s32.f32 %v252
        %v261 = vcvt.s32.f32 %v253
        %v262 = vcvt.s32.f32 %v254
        %v263 = vpack.c.bf16 %v256, %v255
        %v264 = vpack.c.bf16 %v258, %v257
        %v265 = vpack.c.bf16 %v260, %v259
        %v266 = vpack.c.bf16 %v262, %v261
        %v267 = vlaneseq
        %v268 = vshrl.u32 %v267, 7
        %v269 = vsub.s32 2, %v268
        %v270 = vrot.slane %v193, %v269
        %vm271 = vcmp.eq.s32.totalorder %v270, %v195
        %vm272 = vcmp.eq.s32.totalorder %v270, %v196
        %vm273 = vcmp.eq.s32.totalorder %v270, %v197
        %vm274 = vcmp.eq.s32.totalorder %v270, %v198
        %vm275 = vcmp.eq.s32.totalorder %v270, %v199
        %vm276 = vcmp.eq.s32.totalorder %v270, %v200
        %vm277 = vcmp.eq.s32.totalorder %v270, %v201
        %vm278 = vcmp.eq.s32.totalorder %v270, %v202
        %v279 = vsel %vm271, 1, 0
        %v280 = vsel %vm272, 1, 0
        %v281 = vsel %vm273, 1, 0
        %v282 = vsel %vm274, 1, 0
        %v283 = vsel %vm275, 1, 0
        %v284 = vsel %vm276, 1, 0
        %v285 = vsel %vm277, 1, 0
        %v286 = vsel %vm278, 1, 0
        %v287 = vcvt.s32.f32 %v279
        %v288 = vcvt.s32.f32 %v280
        %v289 = vcvt.s32.f32 %v281
        %v290 = vcvt.s32.f32 %v282
        %v291 = vcvt.s32.f32 %v283
        %v292 = vcvt.s32.f32 %v284
        %v293 = vcvt.s32.f32 %v285
        %v294 = vcvt.s32.f32 %v286
        %v295 = vpack.c.bf16 %v288, %v287
        %v296 = vpack.c.bf16 %v290, %v289
        %v297 = vpack.c.bf16 %v292, %v291
        %v298 = vpack.c.bf16 %v294, %v293
        %v299 = vlaneseq
        %v300 = vshrl.u32 %v299, 7
        %v301 = vsub.s32 3, %v300
        %v302 = vrot.slane %v193, %v301
        %vm303 = vcmp.eq.s32.totalorder %v302, %v195
        %vm304 = vcmp.eq.s32.totalorder %v302, %v196
        %vm305 = vcmp.eq.s32.totalorder %v302, %v197
        %vm306 = vcmp.eq.s32.totalorder %v302, %v198
        %vm307 = vcmp.eq.s32.totalorder %v302, %v199
        %vm308 = vcmp.eq.s32.totalorder %v302, %v200
        %vm309 = vcmp.eq.s32.totalorder %v302, %v201
        %vm310 = vcmp.eq.s32.totalorder %v302, %v202
        %v311 = vsel %vm303, 1, 0
        %v312 = vsel %vm304, 1, 0
        %v313 = vsel %vm305, 1, 0
        %v314 = vsel %vm306, 1, 0
        %v315 = vsel %vm307, 1, 0
        %v316 = vsel %vm308, 1, 0
        %v317 = vsel %vm309, 1, 0
        %v318 = vsel %vm310, 1, 0
        %v319 = vcvt.s32.f32 %v311
        %v320 = vcvt.s32.f32 %v312
        %v321 = vcvt.s32.f32 %v313
        %v322 = vcvt.s32.f32 %v314
        %v323 = vcvt.s32.f32 %v315
        %v324 = vcvt.s32.f32 %v316
        %v325 = vcvt.s32.f32 %v317
        %v326 = vcvt.s32.f32 %v318
        %v327 = vpack.c.bf16 %v320, %v319
        %v328 = vpack.c.bf16 %v322, %v321
        %v329 = vpack.c.bf16 %v324, %v323
        %v330 = vpack.c.bf16 %v326, %v325
        %v331 = vld [vmem:[%s1] sm:$0xff]
        %v332 = vld [vmem:[%s1 + $0x8] sm:$0xff]
        %v333 = vld [vmem:[%s1 + $0x10] sm:$0xff]
        %v334 = vld [vmem:[%s1 + $0x18] sm:$0xff]
        %v335 = vld [vmem:[%s1 + $0x20] sm:$0xff]
        %v336 = vld [vmem:[%s1 + $0x28] sm:$0xff]
        %v337 = vld [vmem:[%s1 + $0x30] sm:$0xff]
        %v338 = vld [vmem:[%s1 + $0x38] sm:$0xff]
        %v339 = vld [vmem:[%s1 + $0x40] sm:$0xff]
        %v340 = vld [vmem:[%s1 + $0x48] sm:$0xff]
        %v341 = vld [vmem:[%s1 + $0x50] sm:$0xff]
        %v342 = vld [vmem:[%s1 + $0x58] sm:$0xff]
        %v355 = vunpack.c.l.b16 %v331
        %v356 = vunpack.c.h.b16 %v331
        %v357 = vunpack.c.l.b16 %v332
        %v358 = vunpack.c.h.b16 %v332
        %v359 = vunpack.c.l.b16 %v333
        %v360 = vunpack.c.h.b16 %v333
        %v361 = vunpack.c.l.b16 %v334
        %v362 = vunpack.c.h.b16 %v334
        %v363 = vunpack.c.l.b16 %v335
        %v364 = vunpack.c.h.b16 %v335
        %v365 = vunpack.c.l.b16 %v336
        %v366 = vunpack.c.h.b16 %v336
        %v367 = vunpack.c.l.b16 %v337
        %v368 = vunpack.c.h.b16 %v337
        %v369 = vunpack.c.l.b16 %v338
        %v370 = vunpack.c.h.b16 %v338
        %v371 = vunpack.c.l.b16 %v339
        %v372 = vunpack.c.h.b16 %v339
        %v373 = vunpack.c.l.b16 %v340
        %v374 = vunpack.c.h.b16 %v340
        %v375 = vunpack.c.l.b16 %v341
        %v376 = vunpack.c.h.b16 %v341
        %v377 = vunpack.c.l.b16 %v342
        %v378 = vunpack.c.h.b16 %v342
        %v379 = vpack.c.b16 %v357, %v355
        %v380 = vpack.c.b16 %v358, %v356
        %v381 = vpack.c.b16 %v361, %v359
        %v382 = vpack.c.b16 %v362, %v360
        %v383 = vpack.c.b16 %v365, %v363
        %v384 = vpack.c.b16 %v366, %v364
        %v385 = vpack.c.b16 %v369, %v367
        %v386 = vpack.c.b16 %v370, %v368
        %v387 = vpack.c.b16 %v373, %v371
        %v388 = vpack.c.b16 %v374, %v372
        %v389 = vpack.c.b16 %v377, %v375
        %v390 = vpack.c.b16 %v378, %v376
        %403 = vmatprep.subr.bf16.mxu0 0
        %404 = vmatpush1.bf16.msra.mxu0 %v266
        %405 = vmatprep.subr.bf16.mxu0 0
        %406 = vmatpush1.bf16.msra.mxu0 %v265
        %407 = vmatprep.subr.bf16.mxu0 0
        %408 = vmatpush1.bf16.msra.mxu0 %v264
        %409 = vmatprep.subr.bf16.mxu0 0
        %410 = vmatpush1.bf16.msra.mxu0 %v263
        %411 = vmatprep.subr.bf16.mxu0 0
        %412 = vmatpush1.bf16.msra.mxu0 %v234
        %413 = vmatprep.subr.bf16.mxu0 0
        %414 = vmatpush1.bf16.msra.mxu0 %v233
        %415 = vmatprep.subr.bf16.mxu0 0
        %416 = vmatpush1.bf16.msra.mxu0 %v232
        %417 = vmatprep.subr.bf16.mxu0 0
        %418 = vmatpush1.bf16.msra.mxu0 %v231
        %419 = vmatprep.subr.bf16.mxu0 0
        %420 = vmatpush2.bf16.msra.mxu0 %v330
        %421 = vmatprep.subr.bf16.mxu0 0
        %422 = vmatpush2.bf16.msra.mxu0 %v329
        %423 = vmatprep.subr.bf16.mxu0 0
        %424 = vmatpush2.bf16.msra.mxu0 %v328
        %425 = vmatprep.subr.bf16.mxu0 0
        %426 = vmatpush2.bf16.msra.mxu0 %v327
        %427 = vmatprep.subr.bf16.mxu0 0
        %428 = vmatpush2.bf16.msra.mxu0 %v298
        %429 = vmatprep.subr.bf16.mxu0 0
        %430 = vmatpush2.bf16.msra.mxu0 %v297
        %431 = vmatprep.subr.bf16.mxu0 0
        %432 = vmatpush2.bf16.msra.mxu0 %v296
        %433 = vmatprep.subr.bf16.mxu0 0
        %434 = vmatpush2.bf16.msra.mxu0 %v295
        %435 = vmatprep.mubr.bf16.mxu0 %v380
        %436 = vmatmul.mubr.bf16.gmra.mxu0 %v379
        %v437 = vpop.f32.mrf.mxu0
        %v438 = vadd.f32 0.0, %v437
        %v439 = vpop.f32.mrf.mxu0
        %v440 = vpop.f32.mrf.mxu0
        %v441 = vadd.f32 0.0, %v440
        %v442 = vpop.f32.mrf.mxu0
        %443 = vmatprep.mubr.bf16.mxu0 %v382
        %444 = vmatmul.mubr.bf16.gmra.mxu0 %v381
        %v445 = vpop.f32.mrf.mxu0
        %v446 = vadd.f32 0.0, %v445
        %v447 = vpop.f32.mrf.mxu0
        %v448 = vpop.f32.mrf.mxu0
        %v449 = vadd.f32 0.0, %v448
        %v450 = vpop.f32.mrf.mxu0
        %451 = vmatprep.mubr.bf16.mxu0 %v384
        %452 = vmatmul.mubr.bf16.gmra.mxu0 %v383
        %v453 = vpop.f32.mrf.mxu0
        %v454 = vadd.f32 0.0, %v453
        %v455 = vpop.f32.mrf.mxu0
        %v456 = vpop.f32.mrf.mxu0
        %v457 = vadd.f32 0.0, %v456
        %v458 = vpop.f32.mrf.mxu0
        %459 = vmatprep.mubr.bf16.mxu0 %v386
        %460 = vmatmul.mubr.bf16.gmra.mxu0 %v385
        %v461 = vpop.f32.mrf.mxu0
        %v462 = vadd.f32 0.0, %v461
        %v463 = vpop.f32.mrf.mxu0
        %v464 = vpop.f32.mrf.mxu0
        %v465 = vadd.f32 0.0, %v464
        %v466 = vpop.f32.mrf.mxu0
        %467 = vmatprep.mubr.bf16.mxu0 %v388
        %468 = vmatmul.mubr.bf16.gmra.mxu0 %v387
        %v469 = vpop.f32.mrf.mxu0
        %v470 = vadd.f32 0.0, %v469
        %v471 = vpop.f32.mrf.mxu0
        %v472 = vpop.f32.mrf.mxu0
        %v473 = vadd.f32 0.0, %v472
        %v474 = vpop.f32.mrf.mxu0
        %475 = vmatprep.mubr.bf16.mxu0 %v390
        %476 = vmatmul.mubr.bf16.gmra.mxu0 %v389
        %v477 = vpop.f32.mrf.mxu0
        %v478 = vadd.f32 0.0, %v477
        %v479 = vpop.f32.mrf.mxu0
        %v480 = vpop.f32.mrf.mxu0
        %v481 = vadd.f32 0.0, %v480
        %v482 = vpop.f32.mrf.mxu0
        %483 = vdwg.mxu0
        %v484 = vld [vmem:[%s3] sm:$0xff]
        %v485 = vld [vmem:[%s3 + $0x8] sm:$0xff]
        %v486 = vld [vmem:[%s3 + $0x10] sm:$0xff]
        %v487 = vld [vmem:[%s3 + $0x18] sm:$0xff]
        %v488 = vld [vmem:[%s3 + $0x20] sm:$0xff]
        %v489 = vld [vmem:[%s3 + $0x28] sm:$0xff]
        %v490 = vld [vmem:[%s3 + $0x30] sm:$0xff]
        %v491 = vld [vmem:[%s3 + $0x38] sm:$0xff]
        %493 = vset.pattern.permute.xlu0 0
        %494 = vperm.xlu0 %493, %v484
        %v495 = vpop.permute.xlu0 %494
        %498 = vset.pattern.permute.xlu0 0
        %499 = vperm.xlu0 %498, %v485
        %v500 = vpop.permute.xlu0 %499
        %503 = vset.pattern.permute.xlu0 0
        %504 = vperm.xlu0 %503, %v486
        %v505 = vpop.permute.xlu0 %504
        %508 = vset.pattern.permute.xlu0 0
        %509 = vperm.xlu0 %508, %v487
        %v510 = vpop.permute.xlu0 %509
        %513 = vset.pattern.permute.xlu0 0
        %514 = vperm.xlu0 %513, %v488
        %v515 = vpop.permute.xlu0 %514
        %518 = vset.pattern.permute.xlu0 0
        %519 = vperm.xlu0 %518, %v489
        %v520 = vpop.permute.xlu0 %519
        %523 = vset.pattern.permute.xlu0 0
        %524 = vperm.xlu0 %523, %v490
        %v525 = vpop.permute.xlu0 %524
        %528 = vset.pattern.permute.xlu0 0
        %529 = vperm.xlu0 %528, %v491
        %v530 = vpop.permute.xlu0 %529
        %v532 = vadd.f32 %v454, %v495
        %v533 = vadd.f32 %v457, %v500
        %v534 = vadd.f32 %v462, %v505
        %v535 = vadd.f32 %v465, %v510
        %v536 = vadd.f32 %v470, %v515
        %v537 = vadd.f32 %v473, %v520
        %v538 = vadd.f32 %v478, %v525
        %v539 = vadd.f32 %v481, %v530
        %vm540 = vcmp.lt.s32.totalorder %v195, 32
        %vm541 = vcmp.lt.s32.totalorder %v196, 32
        %vm542 = vcmp.lt.s32.totalorder %v197, 32
        %vm543 = vcmp.lt.s32.totalorder %v198, 32
        %vm544 = vcmp.lt.s32.totalorder %v199, 32
        %vm545 = vcmp.lt.s32.totalorder %v200, 32
        %vm546 = vcmp.lt.s32.totalorder %v201, 32
        %vm547 = vcmp.lt.s32.totalorder %v202, 32
        %v548 = vmul.f32 %v438, %v532
        %v549 = vmul.f32 %v441, %v533
        %v550 = vmul.f32 %v446, %v534
        %v551 = vmul.f32 %v449, %v535
        %v552 = vmul.f32 %v438, %v536
        %v553 = vmul.f32 %v441, %v537
        %v554 = vmul.f32 %v446, %v538
        %v555 = vmul.f32 %v449, %v539
        %v556 = vadd.f32 %v548, %v438
        %v557 = vadd.f32 %v549, %v441
        %v558 = vadd.f32 %v550, %v446
        %v559 = vadd.f32 %v551, %v449
        %v560 = vadd.f32 %v552, %v438
        %v561 = vadd.f32 %v553, %v441
        %v562 = vadd.f32 %v554, %v446
        %v563 = vadd.f32 %v555, %v449
        %v564 = vmax.f32 %v532, 0.0
        %v565 = vmax.f32 %v533, 0.0
        %v566 = vmax.f32 %v534, 0.0
        %v567 = vmax.f32 %v535, 0.0
        %v568 = vmax.f32 %v536, 0.0
        %v569 = vmax.f32 %v537, 0.0
        %v570 = vmax.f32 %v538, 0.0
        %v571 = vmax.f32 %v539, 0.0
        %v572 = vsel %vm540, %v556, %v564
        %v573 = vsel %vm541, %v557, %v565
        %v574 = vsel %vm542, %v558, %v566
        %v575 = vsel %vm543, %v559, %v567
        %v576 = vsel %vm544, %v560, %v568
        %v577 = vsel %vm545, %v561, %v569
        %v578 = vsel %vm546, %v562, %v570
        %v579 = vsel %vm547, %v563, %v571
        %v580 = vld [vmem:[%s2] sm:$0xf]
        %v581 = vld [vmem:[%s2 + $0x4] sm:$0xf]
        %v582 = vld [vmem:[%s2 + $0x8] sm:$0xf]
        %v583 = vld [vmem:[%s2 + $0xc] sm:$0xf]
        %v584 = vld [vmem:[%s2 + $0x10] sm:$0xf]
        %v585 = vld [vmem:[%s2 + $0x14] sm:$0xf]
        %v586 = vld [vmem:[%s2 + $0x18] sm:$0xf]
        %v587 = vld [vmem:[%s2 + $0x1c] sm:$0xf]
        %v588 = vpack.c.bf16 %v573, %v572
        %v589 = vpack.c.bf16 %v575, %v574
        %v590 = vpack.c.bf16 %v577, %v576
        %v591 = vpack.c.bf16 %v579, %v578
        %s592 = scalar_lea.vmem %s3, 64
        %v593 = vld [vmem:[%s592] sm:$0xff]
        %v594 = vld [vmem:[%s592 + $0x8] sm:$0xff]
        %v595 = vld [vmem:[%s592 + $0x10] sm:$0xff]
        %v596 = vld [vmem:[%s592 + $0x18] sm:$0xff]
        %v597 = vld [vmem:[%s592 + $0x20] sm:$0xff]
        %v598 = vld [vmem:[%s592 + $0x28] sm:$0xff]
        %v599 = vld [vmem:[%s592 + $0x30] sm:$0xff]
        %v600 = vld [vmem:[%s592 + $0x38] sm:$0xff]
        %602 = vset.pattern.permute.xlu0 0
        %603 = vperm.xlu0 %602, %v593
        %v604 = vpop.permute.xlu0 %603
        %607 = vset.pattern.permute.xlu0 0
        %608 = vperm.xlu0 %607, %v594
        %v609 = vpop.permute.xlu0 %608
        %612 = vset.pattern.permute.xlu0 0
        %613 = vperm.xlu0 %612, %v595
        %v614 = vpop.permute.xlu0 %613
        %617 = vset.pattern.permute.xlu0 0
        %618 = vperm.xlu0 %617, %v596
        %v619 = vpop.permute.xlu0 %618
        %622 = vset.pattern.permute.xlu0 0
        %623 = vperm.xlu0 %622, %v597
        %v624 = vpop.permute.xlu0 %623
        %627 = vset.pattern.permute.xlu0 0
        %628 = vperm.xlu0 %627, %v598
        %v629 = vpop.permute.xlu0 %628
        %632 = vset.pattern.permute.xlu0 0
        %633 = vperm.xlu0 %632, %v599
        %v634 = vpop.permute.xlu0 %633
        %637 = vset.pattern.permute.xlu0 0
        %638 = vperm.xlu0 %637, %v600
        %v639 = vpop.permute.xlu0 %638
        %v649 = vunpack.c.l.b16 %v580
        %v650 = vunpack.c.l.b16 %v581
        %v651 = vunpack.c.l.b16 %v582
        %v652 = vunpack.c.l.b16 %v583
        %v653 = vunpack.c.l.b16 %v584
        %v654 = vunpack.c.l.b16 %v585
        %v655 = vunpack.c.l.b16 %v586
        %v656 = vunpack.c.l.b16 %v587
        %v657 = vpack.c.b16 %v650, %v649
        %v658 = vpack.c.b16 %v652, %v651
        %v659 = vpack.c.b16 %v654, %v653
        %v660 = vpack.c.b16 %v656, %v655
        %vm661 = vcmask 523264
        %v663 = vsel %vm661, %v657, 0
        %v666 = vsel %vm661, %v658, 0
        %v669 = vsel %vm661, %v659, 0
        %v672 = vsel %vm661, %v660, 0
        %674 = vmatprep.subr.bf16.mxu0 0
        %675 = vmatpush1.bf16.msra.mxu0 0
        %676 = vmatprep.subr.bf16.mxu0 0
        %677 = vmatpush1.bf16.msra.mxu0 0
        %678 = vmatprep.subr.bf16.mxu0 0
        %679 = vmatpush1.bf16.msra.mxu0 0
        %680 = vmatprep.subr.bf16.mxu0 0
        %681 = vmatpush1.bf16.msra.mxu0 0
        %682 = vmatprep.subr.bf16.mxu0 0
        %683 = vmatpush1.bf16.msra.mxu0 %v591
        %684 = vmatprep.subr.bf16.mxu0 0
        %685 = vmatpush1.bf16.msra.mxu0 %v590
        %686 = vmatprep.subr.bf16.mxu0 0
        %687 = vmatpush1.bf16.msra.mxu0 %v589
        %688 = vmatprep.subr.bf16.mxu0 0
        %689 = vmatpush1.bf16.msra.mxu0 %v588
        %690 = vmatprep.subr.bf16.mxu0 0
        %691 = vmatpush2.bf16.msra.mxu0 0
        %692 = vmatprep.subr.bf16.mxu0 0
        %693 = vmatpush2.bf16.msra.mxu0 0
        %694 = vmatprep.subr.bf16.mxu0 0
        %695 = vmatpush2.bf16.msra.mxu0 0
        %696 = vmatprep.subr.bf16.mxu0 0
        %697 = vmatpush2.bf16.msra.mxu0 0
        %698 = vmatprep.subr.bf16.mxu0 0
        %699 = vmatpush2.bf16.msra.mxu0 0
        %700 = vmatprep.subr.bf16.mxu0 0
        %701 = vmatpush2.bf16.msra.mxu0 0
        %702 = vmatprep.subr.bf16.mxu0 0
        %703 = vmatpush2.bf16.msra.mxu0 0
        %704 = vmatprep.subr.bf16.mxu0 0
        %705 = vmatpush2.bf16.msra.mxu0 0
        %706 = vmatprep.mubr.bf16.mxu0 0
        %707 = vmatmul.mubr.bf16.gmra.mxu0 %v663
        %v708 = vpop.f32.mrf.mxu0
        %v709 = vadd.f32 %v604, %v708
        %v710 = vpop.f32.mrf.mxu0
        %v711 = vpop.f32.mrf.mxu0
        %v712 = vadd.f32 %v609, %v711
        %v713 = vpop.f32.mrf.mxu0
        %714 = vmatprep.mubr.bf16.mxu0 0
        %715 = vmatmul.mubr.bf16.gmra.mxu0 %v666
        %v716 = vpop.f32.mrf.mxu0
        %v717 = vadd.f32 %v614, %v716
        %v718 = vpop.f32.mrf.mxu0
        %v719 = vpop.f32.mrf.mxu0
        %v720 = vadd.f32 %v619, %v719
        %v721 = vpop.f32.mrf.mxu0
        %722 = vmatprep.mubr.bf16.mxu0 0
        %723 = vmatmul.mubr.bf16.gmra.mxu0 %v669
        %v724 = vpop.f32.mrf.mxu0
        %v725 = vadd.f32 %v624, %v724
        %v726 = vpop.f32.mrf.mxu0
        %v727 = vpop.f32.mrf.mxu0
        %v728 = vadd.f32 %v629, %v727
        %v729 = vpop.f32.mrf.mxu0
        %730 = vmatprep.mubr.bf16.mxu0 0
        %731 = vmatmul.mubr.bf16.gmra.mxu0 %v672
        %v732 = vpop.f32.mrf.mxu0
        %v733 = vadd.f32 %v634, %v732
        %v734 = vpop.f32.mrf.mxu0
        %v735 = vpop.f32.mrf.mxu0
        %v736 = vadd.f32 %v639, %v735
        %v737 = vpop.f32.mrf.mxu0
        %738 = vdwg.mxu0
        %v739 = vmul.f32 %v438, %v709
        %v740 = vmul.f32 %v441, %v712
        %v741 = vmul.f32 %v446, %v717
        %v742 = vmul.f32 %v449, %v720
        %v743 = vmul.f32 %v438, %v725
        %v744 = vmul.f32 %v441, %v728
        %v745 = vmul.f32 %v446, %v733
        %v746 = vmul.f32 %v449, %v736
        %v747 = vadd.f32 %v739, %v572
        %v748 = vadd.f32 %v740, %v573
        %v749 = vadd.f32 %v741, %v574
        %v750 = vadd.f32 %v742, %v575
        %v751 = vadd.f32 %v743, %v576
        %v752 = vadd.f32 %v744, %v577
        %v753 = vadd.f32 %v745, %v578
        %v754 = vadd.f32 %v746, %v579
        %v755 = vmax.f32 %v709, 0.0
        %v756 = vmax.f32 %v712, 0.0
        %v757 = vmax.f32 %v717, 0.0
        %v758 = vmax.f32 %v720, 0.0
        %v759 = vmax.f32 %v725, 0.0
        %v760 = vmax.f32 %v728, 0.0
        %v761 = vmax.f32 %v733, 0.0
        %v762 = vmax.f32 %v736, 0.0
        %v763 = vsel %vm540, %v747, %v755
        %v764 = vsel %vm541, %v748, %v756
        %v765 = vsel %vm542, %v749, %v757
        %v766 = vsel %vm543, %v750, %v758
        %v767 = vsel %vm544, %v751, %v759
        %v768 = vsel %vm545, %v752, %v760
        %v769 = vsel %vm546, %v753, %v761
        %v770 = vsel %vm547, %v754, %v762
        %s771 = scalar_lea.vmem %s3, 128
        %v772 = vld [vmem:[%s771] sm:$0xff]
        %v773 = vld [vmem:[%s771 + $0x8] sm:$0xff]
        %v774 = vld [vmem:[%s771 + $0x10] sm:$0xff]
        %v775 = vld [vmem:[%s771 + $0x18] sm:$0xff]
        %v776 = vld [vmem:[%s771 + $0x20] sm:$0xff]
        %v777 = vld [vmem:[%s771 + $0x28] sm:$0xff]
        %v778 = vld [vmem:[%s771 + $0x30] sm:$0xff]
        %v779 = vld [vmem:[%s771 + $0x38] sm:$0xff]
        %s780 = scalar_lea.vmem %s3, 192
        %v781 = vld [vmem:[%s780] sm:$0xff]
        %783 = vset.pattern.permute.xlu0 0
        %784 = vperm.xlu0 %783, %v772
        %v785 = vpop.permute.xlu0 %784
        %788 = vset.pattern.permute.xlu0 0
        %789 = vperm.xlu0 %788, %v773
        %v790 = vpop.permute.xlu0 %789
        %793 = vset.pattern.permute.xlu0 0
        %794 = vperm.xlu0 %793, %v774
        %v795 = vpop.permute.xlu0 %794
        %798 = vset.pattern.permute.xlu0 0
        %799 = vperm.xlu0 %798, %v775
        %v800 = vpop.permute.xlu0 %799
        %803 = vset.pattern.permute.xlu0 0
        %804 = vperm.xlu0 %803, %v776
        %v805 = vpop.permute.xlu0 %804
        %808 = vset.pattern.permute.xlu0 0
        %809 = vperm.xlu0 %808, %v777
        %v810 = vpop.permute.xlu0 %809
        %813 = vset.pattern.permute.xlu0 0
        %814 = vperm.xlu0 %813, %v778
        %v815 = vpop.permute.xlu0 %814
        %818 = vset.pattern.permute.xlu0 0
        %819 = vperm.xlu0 %818, %v779
        %v820 = vpop.permute.xlu0 %819
        %v822 = vmul.f32 %v763, %v785
        %v823 = vmul.f32 %v764, %v790
        %v824 = vmul.f32 %v765, %v795
        %v825 = vmul.f32 %v766, %v800
        %v826 = vmul.f32 %v767, %v805
        %v827 = vmul.f32 %v768, %v810
        %v828 = vmul.f32 %v769, %v815
        %v829 = vmul.f32 %v770, %v820
        %v830 = vadd.f32 %v822, %v823
        %v831 = vadd.f32 %v830, %v824
        %v832 = vadd.f32 %v831, %v825
        %v833 = vadd.f32 %v832, %v826
        %v834 = vadd.f32 %v833, %v827
        %v835 = vadd.f32 %v834, %v828
        %v836 = vadd.f32 %v835, %v829
        %v837 = vrot.slane %v836, 4
        %v838 = vadd.f32 %v836, %v837
        %v839 = vrot.slane %v838, 2
        %v840 = vadd.f32 %v838, %v839
        %v841 = vrot.slane %v840, 1
        %v842 = vadd.f32 %v840, %v841
        %844 = vset.pattern.permute.xlu0 0
        %845 = vperm.xlu0 %844, %v781
        %v846 = vpop.permute.xlu0 %845
        %v848 = vadd.f32 %v842, %v846
        %v849 = vmul.f32 %v848, 0.5
        %v850 = vtanh.pop %v849
        %v851 = vmul.f32 %v850, 0.5
        %v852 = vadd.f32 %v851, 0.5
        %853 = vst [vmem:[%s187] sm:$0x1] %v852
        %s854 = sand.u32 %s115, 1
        %s855 = scalar_lea.sflag [#allocation3], %s854
        %s856 = sand.u32 %s115, 1
        %s857 = scalar_lea.vmem [#allocation2], %s856
        // Predicated region
        $region37: #{tpu_custom_call.1} parent=35 // pred_check
          %p858 = pneg %p125
        $region38: #{tpu_custom_call.1} parent=35 // pred_check_branch
          %860 = sbr.rel (%p858) target = $region40
        $region39: #{tpu_custom_call.1} parent=35 // pred_region
          %s862 = ssub.s32 16, 16
          %863 = vsyncadd %s855, %s862
          %s864 = smul.addr %s18, 16
          %s865 = scalar_lea.hbm %s4, %s864
          %s867 = sshll.u32 %s857, 4
          %s868 = int_to_ptr.vmem [resolvable:$true] %s867
          %870 = dma.vmem_to_hbm [thread:$0]  %s868, 16, %s865, %s855
        $region40: #{tpu_custom_call.1} parent=35 // pred_fallthru
          _
      $region36: #{tpu_custom_call.1} parent=5 // pred_fallthru
        _
      %p871 = scmp.le.s32.totalorder 2, %s13
      // Predicated region
      $region41: #{tpu_custom_call.1} parent=5 // pred_check
        %p872 = pneg %p871
      $region42: #{tpu_custom_call.1} parent=5 // pred_check_branch
        %874 = sbr.rel (%p872) target = $region44
      $region43: #{tpu_custom_call.1} parent=5 // pred_region
        %s875 = ssub.s32 %s13, 2
        // Predicated region
        $region45: #{tpu_custom_call.1} parent=43 // pred_check
          %p876 = pneg %p131
        $region46: #{tpu_custom_call.1} parent=43 // pred_check_branch
          %878 = sbr.rel (%p876) target = $region48
        $region47: #{tpu_custom_call.1} parent=43 // pred_region
          %s879 = sand.u32 %s116, 1
          %s880 = scalar_lea.sflag [#allocation3], %s879
          %s881 = sand.u32 %s116, 1
          %s882 = scalar_lea.vmem [#allocation2], %s881
          %883 = dma.done %s880, 16
        $region48: #{tpu_custom_call.1} parent=43 // pred_fallthru
          _
      $region44: #{tpu_custom_call.1} parent=5 // pred_fallthru
        _
    $region6: #{tpu_custom_call.1} parent=1 // loop_footer
      %s17 = sadd.s32 1, %s13
    $region7: #{tpu_custom_call.1} parent=1 // loop_footer_branch
      %12 = sbr.rel target = $region3
    $region8: #{tpu_custom_call.1} parent=1 // loop_exit
      _
    %884 = vsyncpa [#allocation3], 1
    %s885 = scalar_lea.sflag [#allocation3], 1
    %886 = vsyncpa %s885, 1

</llo_original>
